<compile_context>
chip_gen: v5e
topology: v5e:2x2
jax: 0.10.0
libtpu: 0.0.40
codegen_flags: <defaults>
</compile_context>

<pallas_src>
import functools

import jax
import jax.numpy as jnp
from jax.experimental import pallas as pl
from jax.experimental.pallas import tpu as pltpu


def _round_up(n, m):
    return ((n + m - 1) // m) * m


def _block_vmem_bytes(shape, dtype):
    """Approx VMEM footprint of a 2-D block, padded to the (8, 128) tiling."""
    r = _round_up(shape[0], 8)
    c = _round_up(shape[1], 128)
    return r * c * jnp.dtype(dtype).itemsize


_VMEM_BUDGET = 40 << 20   # decision budget for making w4 resident
_VMEM_LIMIT = 48 << 20    # scoped limit handed to Mosaic (fits v7x 64 MiB)


def decoder_kernel(x_ref, w1_ref, b1_ref, w2_ref, b2_ref,
                   w3_ref, b3_ref, w4_ref, b4_ref, o_ref, *, epilogue_dtype):
    """Fused fc1..fc4 on one (batch tile, fc4-output tile). No scratch."""
    h = jnp.dot(x_ref[...], w1_ref[...], preferred_element_type=jnp.float32)
    h = jnp.maximum(h + b1_ref[...], 0.0)                          # relu(fc1)
    h = jnp.dot(h, w2_ref[...], preferred_element_type=jnp.float32)
    h = jnp.maximum(h + b2_ref[...], 0.0)                          # relu(fc2)
    h = jnp.dot(h.astype(w3_ref.dtype), w3_ref[...],
                preferred_element_type=jnp.float32)
    h = jnp.maximum(h + b3_ref[...], 0.0)                          # relu(fc3)
    out = jnp.dot(h.astype(w4_ref.dtype), w4_ref[...],
                  preferred_element_type=jnp.float32)
    z = (out + b4_ref[...]).astype(epilogue_dtype)                 # fc4 + bias
    o_ref[...] = (4.0 * jnp.tanh(z)).astype(o_ref.dtype)           # scale*tanh


def decoder_forward(x, params, *, tm=512, max_tn=512,
                    out_dtype=jnp.float32, epilogue_dtype=jnp.float32,
                    w4_resident=None):
    """x: (B, 8) f32; params: weights pre-transposed (in, out), biases (1, out)."""
    B, f_in = x.shape
    assert f_in == 8
    out_size = params["w4"].shape[1]
    w4, b4 = params["w4"], params["b4"]

    # Batch tile: MXU-edge multiple (256 -> also a multiple of 128 for v5e).
    # Small batches collapse to one tile rounded to 16 rows (bf16-pack safe).
    TM = _round_up(tm, 256)
    if B <= TM:
        TM = _round_up(B, 16)
    B_pad = _round_up(B, TM)
    if B_pad != B:
        x = jnp.pad(x, ((0, B_pad - B), (0, 0)))

    # fc1..fc3 weights are always resident (~0.3 MiB with double buffers).
    small = [((8, 16), params["w1"].dtype), ((1, 16), params["b1"].dtype),
             ((16, 64), params["w2"].dtype), ((1, 64), params["b2"].dtype),
             ((64, 512), params["w3"].dtype), ((1, 512), params["b3"].dtype)]
    small_bytes = sum(2 * _block_vmem_bytes(s, d) for s, d in small)

    if w4_resident is None:
        est = (small_bytes
               + 2 * _block_vmem_bytes((TM, 8), x.dtype)
               + 2 * _block_vmem_bytes((TM, out_size), out_dtype)
               + 2 * _block_vmem_bytes((512, out_size), w4.dtype)
               + 2 * _block_vmem_bytes((1, out_size), b4.dtype))
        w4_resident = est <= _VMEM_BUDGET

    kernel = functools.partial(decoder_kernel, epilogue_dtype=epilogue_dtype)

    if w4_resident:
        # ---- default path: grid = (batch tiles,), every weight DMA'd once.
        grid = (B_pad // TM,)
        in_specs = [
            pl.BlockSpec((TM, 8), lambda i: (i, 0)),            # x: batch-tiled
            pl.BlockSpec((8, 16), lambda i: (0, 0)),            # fc1 (resident)
            pl.BlockSpec((1, 16), lambda i: (0, 0)),
            pl.BlockSpec((16, 64), lambda i: (0, 0)),           # fc2 (resident)
            pl.BlockSpec((1, 64), lambda i: (0, 0)),
            pl.BlockSpec((64, 512), lambda i: (0, 0)),          # fc3 (resident)
            pl.BlockSpec((1, 512), lambda i: (0, 0)),
            pl.BlockSpec((512, out_size), lambda i: (0, 0)),    # fc4 (resident)
            pl.BlockSpec((1, out_size), lambda i: (0, 0)),
        ]
        out = pl.pallas_call(
            kernel,
            out_shape=jax.ShapeDtypeStruct((B_pad, out_size), out_dtype),
            grid=grid,
            in_specs=in_specs,
            out_specs=pl.BlockSpec((TM, out_size), lambda i: (i, 0)),
            compiler_params=pltpu.CompilerParams(
                dimension_semantics=("parallel",),
                vmem_limit_bytes=_VMEM_LIMIT),
        )(x, params["w1"], params["b1"], params["w2"], params["b2"],
          params["w3"], params["b3"], w4, b4)
        return out[:B] if B_pad != B else out

    # ---- tiled fallback: fc4-output axis OUTER, batch axis INNER so each w4
    # tile streams from HBM exactly once; fc1-fc3 recomputed per step.
    TN = max(128, min(max_tn - max_tn % 128, _round_up(out_size, 128)))
    out_pad = _round_up(out_size, TN)             # lane-dense, bounded out tile
    if out_pad != out_size:
        w4 = jnp.pad(w4, ((0, 0), (0, out_pad - out_size)))
        b4 = jnp.pad(b4, ((0, 0), (0, out_pad - out_size)))

    grid = (out_pad // TN, B_pad // TM)           # (j outer, i inner)
    in_specs = [
        pl.BlockSpec((TM, 8), lambda j, i: (i, 0)),             # x: batch-tiled
        pl.BlockSpec((8, 16), lambda j, i: (0, 0)),             # fc1 (resident)
        pl.BlockSpec((1, 16), lambda j, i: (0, 0)),
        pl.BlockSpec((16, 64), lambda j, i: (0, 0)),            # fc2 (resident)
        pl.BlockSpec((1, 64), lambda j, i: (0, 0)),
        pl.BlockSpec((64, 512), lambda j, i: (0, 0)),           # fc3 (resident)
        pl.BlockSpec((1, 512), lambda j, i: (0, 0)),
        pl.BlockSpec((512, TN), lambda j, i: (0, j)),           # fc4: out-tiled
        pl.BlockSpec((1, TN), lambda j, i: (0, j)),
    ]
    out = pl.pallas_call(
        kernel,
        out_shape=jax.ShapeDtypeStruct((B_pad, out_pad), out_dtype),
        grid=grid,
        in_specs=in_specs,
        out_specs=pl.BlockSpec((TM, TN), lambda j, i: (i, j)),
        compiler_params=pltpu.CompilerParams(
            dimension_semantics=("parallel", "parallel"),
            vmem_limit_bytes=_VMEM_LIMIT),
    )(x, params["w1"], params["b1"], params["w2"], params["b2"],
      params["w3"], params["b3"], w4, b4)
    return out[:B, :out_size]


def init_params(key, output_size):
    """PyTorch Linear default init: U(-1/sqrt(fan_in), 1/sqrt(fan_in)).
    Weights stored transposed (in, out); biases stored (1, out)."""
    dims = [(8, 16), (16, 64), (64, 512), (512, output_size)]
    params = {}
    keys = jax.random.split(key, 2 * len(dims))
    for i, (fan_in, fan_out) in enumerate(dims):
        bound = 1.0 / (fan_in ** 0.5)
        params[f"w{i + 1}"] = jax.random.uniform(
            keys[2 * i], (fan_in, fan_out),
            minval=-bound, maxval=bound, dtype=jnp.float32)
        params[f"b{i + 1}"] = jax.random.uniform(
            keys[2 * i + 1], (1, fan_out),
            minval=-bound, maxval=bound, dtype=jnp.float32)
    return params


def cast_heavy_to_bf16(params):
    """v6e/v7x: store the FLOP/DMA-dominant fc3/fc4 weights in bf16."""
    p = dict(params)
    p["w3"] = params["w3"].astype(jnp.bfloat16)
    p["w4"] = params["w4"].astype(jnp.bfloat16)
    return p


def decoder_reference(x, params):
    h = jnp.maximum(x @ params["w1"].astype(jnp.float32) + params["b1"], 0.0)
    h = jnp.maximum(h @ params["w2"].astype(jnp.float32) + params["b2"], 0.0)
    h = jnp.maximum(h @ params["w3"].astype(jnp.float32) + params["b3"], 0.0)
    return 4.0 * jnp.tanh(h @ params["w4"].astype(jnp.float32) + params["b4"])


if __name__ == "__main__":
    key = jax.random.PRNGKey(0)
    k_param, k_x1, k_x2 = jax.random.split(key, 3)

    # ---- config 1: small batch/output -> resident-w4 path, grid = (1,) -----
    out_size = 128
    params = init_params(k_param, out_size)
    x = jax.random.normal(k_x1, (8, 8), dtype=jnp.float32)
    out = jax.block_until_ready(decoder_forward(x, params))
    ref = decoder_reference(x, params)
    assert out.shape == (8, out_size)
    assert jnp.allclose(out, ref, atol=1e-5, rtol=1e-5)

    # ---- config 2: non-128-multiple output size ------------------------------
    out_size2 = 200
    params2 = init_params(k_param, out_size2)
    x2 = jax.random.normal(k_x2, (24, 8), dtype=jnp.float32)
    ref2 = decoder_reference(x2, params2)

    # 2a: auto (resident) path
    out2a = jax.block_until_ready(decoder_forward(x2, params2))
    assert out2a.shape == (24, out_size2)
    assert jnp.allclose(out2a, ref2, atol=1e-5, rtol=1e-5)

    # 2b: forced tiled fallback (exercises output padding + inverted grid)
    out2b = jax.block_until_ready(
        decoder_forward(x2, params2, tm=8, max_tn=128, w4_resident=False))
    assert out2b.shape == (24, out_size2)
    assert jnp.allclose(out2b, ref2, atol=1e-5, rtol=1e-5)

    # ---- config 3: bf16 fc3/fc4 weights (v6e/v7x MXU rate), tiled path ------
    out3 = jax.block_until_ready(
        decoder_forward(x2, cast_heavy_to_bf16(params2),
                        tm=8, max_tn=128, w4_resident=False))
    assert jnp.allclose(out3, ref2, atol=1e-1, rtol=1e-1)

    # ---- config 4: bf16 output + bf16 tanh epilogue (v6e/v7x), resident -----
    out4 = jax.block_until_ready(
        decoder_forward(x2, cast_heavy_to_bf16(params2),
                        out_dtype=jnp.bfloat16, epilogue_dtype=jnp.bfloat16))
    assert out4.dtype == jnp.bfloat16
    assert jnp.allclose(out4.astype(jnp.float32), ref2, atol=1e-1, rtol=1e-1)

    print("KERNEL_OK")
</pallas_src>

<mosaic_0001>
module attributes {stable_mosaic.version = 11 : i64} {
  func.func @decoder_kernel(%arg0: i32, %arg1: memref<16x8xf32, #tpu.memory_space<vmem>>, %arg2: memref<8x16xf32, #tpu.memory_space<vmem>>, %arg3: memref<1x16xf32, #tpu.memory_space<vmem>>, %arg4: memref<16x64xf32, #tpu.memory_space<vmem>>, %arg5: memref<1x64xf32, #tpu.memory_space<vmem>>, %arg6: memref<64x512xf32, #tpu.memory_space<vmem>>, %arg7: memref<1x512xf32, #tpu.memory_space<vmem>>, %arg8: memref<512x128xf32, #tpu.memory_space<vmem>>, %arg9: memref<1x128xf32, #tpu.memory_space<vmem>>, %arg10: memref<16x128xf32, #tpu.memory_space<vmem>>) attributes {dimension_semantics = [#tpu.dimension_semantics<parallel>], iteration_bounds = array<i64: 1>, scalar_prefetch = 0 : i64, scratch_operands = 0 : i64, tpu.core_type = #tpu.core_type<tc>, window_params = [{transform_indices = @transform_0, window_bounds = array<i64: 16, 8>}, {pipeline_mode = #tpu.pipeline_mode<synchronous>, transform_indices = @transform_1, window_bounds = array<i64: 8, 16>}, {pipeline_mode = #tpu.pipeline_mode<synchronous>, transform_indices = @transform_2, window_bounds = array<i64: 1, 16>}, {pipeline_mode = #tpu.pipeline_mode<synchronous>, transform_indices = @transform_3, window_bounds = array<i64: 16, 64>}, {pipeline_mode = #tpu.pipeline_mode<synchronous>, transform_indices = @transform_4, window_bounds = array<i64: 1, 64>}, {pipeline_mode = #tpu.pipeline_mode<synchronous>, transform_indices = @transform_5, window_bounds = array<i64: 64, 512>}, {pipeline_mode = #tpu.pipeline_mode<synchronous>, transform_indices = @transform_6, window_bounds = array<i64: 1, 512>}, {pipeline_mode = #tpu.pipeline_mode<synchronous>, transform_indices = @transform_7, window_bounds = array<i64: 512, 128>}, {pipeline_mode = #tpu.pipeline_mode<synchronous>, transform_indices = @transform_8, window_bounds = array<i64: 1, 128>}, {transform_indices = @transform_9, window_bounds = array<i64: 16, 128>}]} {
    %c0 = arith.constant 0 : index
    %c0_0 = arith.constant 0 : index
    %0 = vector.load %arg1[%c0, %c0_0] : memref<16x8xf32, #tpu.memory_space<vmem>>, vector<16x8xf32>
    %c0_1 = arith.constant 0 : index
    %c0_2 = arith.constant 0 : index
    %1 = vector.load %arg2[%c0_1, %c0_2] : memref<8x16xf32, #tpu.memory_space<vmem>>, vector<8x16xf32>
    %cst = arith.constant dense<0.000000e+00> : vector<16x16xf32>
    %2 = tpu.matmul %0, %1, %cst {dimension_numbers = #tpu.dot_dimension_numbers<[1], [0], [0], [1], [0, 0, 1, 1], [], []>} : vector<16x8xf32>, vector<8x16xf32>, vector<16x16xf32> -> vector<16x16xf32>
    %c0_3 = arith.constant 0 : index
    %c0_4 = arith.constant 0 : index
    %3 = vector.load %arg3[%c0_3, %c0_4] : memref<1x16xf32, #tpu.memory_space<vmem>>, vector<1x16xf32>
    %4 = vector.broadcast %3 : vector<1x16xf32> to vector<16x16xf32>
    %5 = arith.addf %2, %4 : vector<16x16xf32>
    %cst_5 = arith.constant 0.000000e+00 : f32
    %6 = vector.broadcast %cst_5 : f32 to vector<16x16xf32>
    %7 = arith.maximumf %5, %6 : vector<16x16xf32>
    %c0_6 = arith.constant 0 : index
    %c0_7 = arith.constant 0 : index
    %8 = vector.load %arg4[%c0_6, %c0_7] : memref<16x64xf32, #tpu.memory_space<vmem>>, vector<16x64xf32>
    %cst_8 = arith.constant dense<0.000000e+00> : vector<16x64xf32>
    %9 = tpu.matmul %7, %8, %cst_8 {dimension_numbers = #tpu.dot_dimension_numbers<[1], [0], [0], [1], [0, 0, 1, 1], [], []>} : vector<16x16xf32>, vector<16x64xf32>, vector<16x64xf32> -> vector<16x64xf32>
    %c0_9 = arith.constant 0 : index
    %c0_10 = arith.constant 0 : index
    %10 = vector.load %arg5[%c0_9, %c0_10] : memref<1x64xf32, #tpu.memory_space<vmem>>, vector<1x64xf32>
    %11 = vector.broadcast %10 : vector<1x64xf32> to vector<16x64xf32>
    %12 = arith.addf %9, %11 : vector<16x64xf32>
    %cst_11 = arith.constant 0.000000e+00 : f32
    %13 = vector.broadcast %cst_11 : f32 to vector<16x64xf32>
    %14 = arith.maximumf %12, %13 : vector<16x64xf32>
    %c0_12 = arith.constant 0 : index
    %c0_13 = arith.constant 0 : index
    %15 = vector.load %arg6[%c0_12, %c0_13] : memref<64x512xf32, #tpu.memory_space<vmem>>, vector<64x512xf32>
    %cst_14 = arith.constant dense<0.000000e+00> : vector<16x512xf32>
    %16 = tpu.matmul %14, %15, %cst_14 {dimension_numbers = #tpu.dot_dimension_numbers<[1], [0], [0], [1], [0, 0, 1, 1], [], []>} : vector<16x64xf32>, vector<64x512xf32>, vector<16x512xf32> -> vector<16x512xf32>
    %c0_15 = arith.constant 0 : index
    %c0_16 = arith.constant 0 : index
    %17 = vector.load %arg7[%c0_15, %c0_16] : memref<1x512xf32, #tpu.memory_space<vmem>>, vector<1x512xf32>
    %18 = vector.broadcast %17 : vector<1x512xf32> to vector<16x512xf32>
    %19 = arith.addf %16, %18 : vector<16x512xf32>
    %cst_17 = arith.constant 0.000000e+00 : f32
    %20 = vector.broadcast %cst_17 : f32 to vector<16x512xf32>
    %21 = arith.maximumf %19, %20 : vector<16x512xf32>
    %c0_18 = arith.constant 0 : index
    %c0_19 = arith.constant 0 : index
    %22 = vector.load %arg8[%c0_18, %c0_19] : memref<512x128xf32, #tpu.memory_space<vmem>>, vector<512x128xf32>
    %cst_20 = arith.constant dense<0.000000e+00> : vector<16x128xf32>
    %23 = tpu.matmul %21, %22, %cst_20 {dimension_numbers = #tpu.dot_dimension_numbers<[1], [0], [0], [1], [0, 0, 1, 1], [], []>} : vector<16x512xf32>, vector<512x128xf32>, vector<16x128xf32> -> vector<16x128xf32>
    %c0_21 = arith.constant 0 : index
    %c0_22 = arith.constant 0 : index
    %24 = vector.load %arg9[%c0_21, %c0_22] : memref<1x128xf32, #tpu.memory_space<vmem>>, vector<1x128xf32>
    %25 = vector.broadcast %24 : vector<1x128xf32> to vector<16x128xf32>
    %26 = arith.addf %23, %25 : vector<16x128xf32>
    %27 = math.tanh %26 : vector<16x128xf32>
    %cst_23 = arith.constant 4.000000e+00 : f32
    %28 = vector.broadcast %cst_23 : f32 to vector<16x128xf32>
    %29 = arith.mulf %28, %27 : vector<16x128xf32>
    %c0_24 = arith.constant 0 : index
    %c0_25 = arith.constant 0 : index
    %30 = vector.load %arg10[%c0_24, %c0_25] : memref<16x128xf32, #tpu.memory_space<vmem>>, vector<16x128xf32>
    tpu.vector_store %arg10[%c0_24, %c0_25], %29 {strides = array<i32>} : memref<16x128xf32, #tpu.memory_space<vmem>>, vector<16x128xf32>,
    return
  }
  func.func @transform_0(%arg0: i32) -> (i32, i32) {
    %c0_i32 = arith.constant 0 : i32
    %c0_i32_0 = arith.constant 0 : i32
    return %arg0, %c0_i32 : i32, i32
  }
  func.func @transform_1(%arg0: i32) -> (i32, i32) {
    %c0_i32 = arith.constant 0 : i32
    %c0_i32_0 = arith.constant 0 : i32
    %c0_i32_1 = arith.constant 0 : i32
    return %c0_i32, %c0_i32_0 : i32, i32
  }
  func.func @transform_2(%arg0: i32) -> (i32, i32) {
    %c0_i32 = arith.constant 0 : i32
    %c0_i32_0 = arith.constant 0 : i32
    %c0_i32_1 = arith.constant 0 : i32
    return %c0_i32, %c0_i32_0 : i32, i32
  }
  func.func @transform_3(%arg0: i32) -> (i32, i32) {
    %c0_i32 = arith.constant 0 : i32
    %c0_i32_0 = arith.constant 0 : i32
    %c0_i32_1 = arith.constant 0 : i32
    return %c0_i32, %c0_i32_0 : i32, i32
  }
  func.func @transform_4(%arg0: i32) -> (i32, i32) {
    %c0_i32 = arith.constant 0 : i32
    %c0_i32_0 = arith.constant 0 : i32
    %c0_i32_1 = arith.constant 0 : i32
    return %c0_i32, %c0_i32_0 : i32, i32
  }
  func.func @transform_5(%arg0: i32) -> (i32, i32) {
    %c0_i32 = arith.constant 0 : i32
    %c0_i32_0 = arith.constant 0 : i32
    %c0_i32_1 = arith.constant 0 : i32
    return %c0_i32, %c0_i32_0 : i32, i32
  }
  func.func @transform_6(%arg0: i32) -> (i32, i32) {
    %c0_i32 = arith.constant 0 : i32
    %c0_i32_0 = arith.constant 0 : i32
    %c0_i32_1 = arith.constant 0 : i32
    return %c0_i32, %c0_i32_0 : i32, i32
  }
  func.func @transform_7(%arg0: i32) -> (i32, i32) {
    %c0_i32 = arith.constant 0 : i32
    %c0_i32_0 = arith.constant 0 : i32
    %c0_i32_1 = arith.constant 0 : i32
    return %c0_i32, %c0_i32_0 : i32, i32
  }
  func.func @transform_8(%arg0: i32) -> (i32, i32) {
    %c0_i32 = arith.constant 0 : i32
    %c0_i32_0 = arith.constant 0 : i32
    %c0_i32_1 = arith.constant 0 : i32
    return %c0_i32, %c0_i32_0 : i32, i32
  }
  func.func @transform_9(%arg0: i32) -> (i32, i32) {
    %c0_i32 = arith.constant 0 : i32
    %c0_i32_0 = arith.constant 0 : i32
    return %arg0, %c0_i32 : i32, i32
  }
}

</mosaic_0001>

<llo_original>
// kernel: tpu_custom_call.1
$region0: #{tpu_custom_call.1}
  #allocation0 [shape = 'u32[]', space=smem, size = 0x4, offset = 0x4, fixed_abs, tag = 'smem constant byte address 0x4 - core index']
  #allocation1 [shape = 'u32[72,128]{1,0:T(1,128)}', space=vmem, size = 0x9000, scoped, tag = 'internal scratch']
  %s0 = inlined_call_operand.vmem [shape: f32[16,8], index: 0, kind: input, shape index: {}]
  %s1 = inlined_call_operand.vmem [shape: f32[8,16], index: 1, kind: input, shape index: {}]
  %s2 = inlined_call_operand.hbm [shape: f32[1,16], index: 2, kind: input, shape index: {}]
  %s3 = inlined_call_operand.vmem [shape: f32[16,64], index: 3, kind: input, shape index: {}]
  %s4 = inlined_call_operand.hbm [shape: f32[1,64], index: 4, kind: input, shape index: {}]
  %s5 = inlined_call_operand.hbm [shape: f32[64,512], index: 5, kind: input, shape index: {}]
  %s6 = inlined_call_operand.vmem [shape: f32[1,512], index: 6, kind: input, shape index: {}]
  %s7 = inlined_call_operand.hbm [shape: f32[512,128], index: 7, kind: input, shape index: {}]
  %s8 = inlined_call_operand.vmem [shape: f32[1,128], index: 8, kind: input, shape index: {}]
  %s9 = inlined_call_operand.hbm [shape: f32[16,128], index: 9, kind: output, shape index: {}]
  %s10 = sld [smem:[#allocation0]]
  $region62: #{tpu_custom_call.1} parent=0
    _
  %s12 = ssub.s32 1, %s10
  %s13 = scalar_select 0, %s12, %s10
  $region1: #{tpu_custom_call.1} parent=0
    #allocation2 [shape = 'u8[512]{0}', space=vmem, size = 0x400, scoped, tag = 'input window, operand 2, single buffered']
    #allocation3 [shape = 's32[1]{0}', space=sflag, size = 0x4, scoped, tag = 'scoped memory for tpu_custom_call.1']
    #allocation4 [shape = 's32[1]{0}', space=sflag, size = 0x4, scoped, tag = 'scoped memory for tpu_custom_call.1']
    #allocation5 [shape = 'u8[512]{0}', space=vmem, size = 0x400, scoped, tag = 'input window, operand 4, single buffered']
    #allocation6 [shape = 's32[1]{0}', space=sflag, size = 0x4, scoped, tag = 'scoped memory for tpu_custom_call.1']
    #allocation7 [shape = 'u8[131072]{0}', space=vmem, size = 0x20000, scoped, tag = 'input window, operand 5, single buffered']
    #allocation8 [shape = 'u8[262144]{0}', space=vmem, size = 0x40000, scoped, tag = 'input window, operand 7, single buffered']
    #allocation9 [shape = 's32[1]{0}', space=sflag, size = 0x4, scoped, tag = 'scoped memory for tpu_custom_call.1']
    #allocation10 [shape = 'u8[8192]{0}', space=vmem, size = 0x2000, scoped, tag = 'output window, operand 0, single buffered']
    %14 = vsyncpa [#allocation3], 0
    %15 = vsyncpa [#allocation6], 0
    %16 = vsyncpa [#allocation9], 0
    %17 = vsyncpa [#allocation4], 0
    // Predicated region
    $region2: #{tpu_custom_call.1} parent=1 // pred_check
      _
    $region3: #{tpu_custom_call.1} parent=1 // pred_check_branch
      %19 = sbr.rel (0) target = $region5
    $region4: #{tpu_custom_call.1} parent=1 // pred_region
      _
    $region5: #{tpu_custom_call.1} parent=1 // pred_fallthru
      _
    // Predicated region
    $region6: #{tpu_custom_call.1} parent=1 // pred_check
      _
    $region7: #{tpu_custom_call.1} parent=1 // pred_check_branch
      %21 = sbr.rel (0) target = $region9
    $region8: #{tpu_custom_call.1} parent=1 // pred_region
      _
    $region9: #{tpu_custom_call.1} parent=1 // pred_fallthru
      _
    // Predicated region
    $region10: #{tpu_custom_call.1} parent=1 // pred_check
      _
    $region11: #{tpu_custom_call.1} parent=1 // pred_check_branch
      %23 = sbr.rel (0) target = $region13
    $region12: #{tpu_custom_call.1} parent=1 // pred_region
      %25 = vsyncadd [#allocation3], 0
      %s27 = sshll.u32 %s2, 4
      %s28 = int_to_ptr.hbm [resolvable:$true] %s27
      %s29 = sshll.u32 [#allocation2], 4
      %s30 = int_to_ptr.vmem [resolvable:$true] %s29
      %32 = dma.hbm_to_vmem [thread:$0]  %s28, 16, %s30, [#allocation3]
    $region13: #{tpu_custom_call.1} parent=1 // pred_fallthru
      _
    // Predicated region
    $region14: #{tpu_custom_call.1} parent=1 // pred_check
      _
    $region15: #{tpu_custom_call.1} parent=1 // pred_check_branch
      %34 = sbr.rel (0) target = $region17
    $region16: #{tpu_custom_call.1} parent=1 // pred_region
      _
    $region17: #{tpu_custom_call.1} parent=1 // pred_fallthru
      _
    // Predicated region
    $region18: #{tpu_custom_call.1} parent=1 // pred_check
      _
    $region19: #{tpu_custom_call.1} parent=1 // pred_check_branch
      %36 = sbr.rel (0) target = $region21
    $region20: #{tpu_custom_call.1} parent=1 // pred_region
      %38 = vsyncadd [#allocation6], 0
      %s40 = sshll.u32 %s4, 4
      %s41 = int_to_ptr.hbm [resolvable:$true] %s40
      %s42 = sshll.u32 [#allocation5], 4
      %s43 = int_to_ptr.vmem [resolvable:$true] %s42
      %45 = dma.hbm_to_vmem [thread:$0]  %s41, 16, %s43, [#allocation6]
    $region21: #{tpu_custom_call.1} parent=1 // pred_fallthru
      _
    // Predicated region
    $region22: #{tpu_custom_call.1} parent=1 // pred_check
      _
    $region23: #{tpu_custom_call.1} parent=1 // pred_check_branch
      %47 = sbr.rel (0) target = $region25
    $region24: #{tpu_custom_call.1} parent=1 // pred_region
      %49 = vsyncadd [#allocation6], 0
      %s50 = sshll.u32 %s5, 4
      %s51 = int_to_ptr.hbm [resolvable:$true] %s50
      %s52 = sshll.u32 [#allocation7], 4
      %s53 = int_to_ptr.vmem [resolvable:$true] %s52
      %58 = dma.hbm_to_vmem [thread:$0]  %s51, 4096, %s53, [#allocation6], 512, 512, 32
    $region25: #{tpu_custom_call.1} parent=1 // pred_fallthru
      _
    // Predicated region
    $region26: #{tpu_custom_call.1} parent=1 // pred_check
      _
    $region27: #{tpu_custom_call.1} parent=1 // pred_check_branch
      %60 = sbr.rel (0) target = $region29
    $region28: #{tpu_custom_call.1} parent=1 // pred_region
      _
    $region29: #{tpu_custom_call.1} parent=1 // pred_fallthru
      _
    // Predicated region
    $region30: #{tpu_custom_call.1} parent=1 // pred_check
      _
    $region31: #{tpu_custom_call.1} parent=1 // pred_check_branch
      %62 = sbr.rel (0) target = $region33
    $region32: #{tpu_custom_call.1} parent=1 // pred_region
      %64 = vsyncadd [#allocation9], 0
      %s65 = sshll.u32 %s7, 4
      %s66 = int_to_ptr.hbm [resolvable:$true] %s65
      %s67 = sshll.u32 [#allocation8], 4
      %s68 = int_to_ptr.vmem [resolvable:$true] %s67
      %73 = dma.hbm_to_vmem [thread:$0]  %s66, 8192, %s68, [#allocation9], 128, 128, 8
    $region33: #{tpu_custom_call.1} parent=1 // pred_fallthru
      _
    // Predicated region
    $region34: #{tpu_custom_call.1} parent=1 // pred_check
      _
    $region35: #{tpu_custom_call.1} parent=1 // pred_check_branch
      %75 = sbr.rel (0) target = $region37
    $region36: #{tpu_custom_call.1} parent=1 // pred_region
      _
    $region37: #{tpu_custom_call.1} parent=1 // pred_fallthru
      _
    // Predicated region
    $region38: #{tpu_custom_call.1} parent=1 // pred_check
      _
    $region39: #{tpu_custom_call.1} parent=1 // pred_check_branch
      %77 = sbr.rel (0) target = $region41
    $region40: #{tpu_custom_call.1} parent=1 // pred_region
      %79 = dma.done [#allocation3], 16
    $region41: #{tpu_custom_call.1} parent=1 // pred_fallthru
      _
    // Predicated region
    $region42: #{tpu_custom_call.1} parent=1 // pred_check
      _
    $region43: #{tpu_custom_call.1} parent=1 // pred_check_branch
      %81 = sbr.rel (0) target = $region45
    $region44: #{tpu_custom_call.1} parent=1 // pred_region
      %83 = dma.done [#allocation6], 16
    $region45: #{tpu_custom_call.1} parent=1 // pred_fallthru
      _
    // Predicated region
    $region46: #{tpu_custom_call.1} parent=1 // pred_check
      _
    $region47: #{tpu_custom_call.1} parent=1 // pred_check_branch
      %85 = sbr.rel (0) target = $region49
    $region48: #{tpu_custom_call.1} parent=1 // pred_region
      %87 = dma.done [#allocation6], 4096
    $region49: #{tpu_custom_call.1} parent=1 // pred_fallthru
      _
    // Predicated region
    $region50: #{tpu_custom_call.1} parent=1 // pred_check
      _
    $region51: #{tpu_custom_call.1} parent=1 // pred_check_branch
      %89 = sbr.rel (0) target = $region53
    $region52: #{tpu_custom_call.1} parent=1 // pred_region
      %91 = dma.done [#allocation9], 8192
    $region53: #{tpu_custom_call.1} parent=1 // pred_fallthru
      _
    %v92 = vld [vmem:[%s0] sm:$0xff]
    %v93 = vld [vmem:[%s0 + $0x8] sm:$0xff]
    %v94 = vld [vmem:[%s1] sm:$0xff]
    %v95 = vld [vmem:[#allocation2] sm:$0x1]
    %v97 = vperm.slane %v95, 0
    %vm99 = vcmask 64512
    %v101 = vsel %vm99, %v92, 0
    %v104 = vsel %vm99, %v93, 0
    %106 = vmatpush.msra.mxu0 0.0
    %107 = vmatpush.msra.mxu0 0.0
    %108 = vmatpush.msra.mxu0 0.0
    %109 = vmatpush.msra.mxu0 0.0
    %110 = vmatpush.msra.mxu0 0.0
    %111 = vmatpush.msra.mxu0 0.0
    %112 = vmatpush.msra.mxu0 0.0
    %113 = vmatpush.msra.mxu0 0.0
    %114 = vmatpush.msra.mxu0 0.0
    %115 = vmatpush.msra.mxu0 0.0
    %116 = vmatpush.msra.mxu0 0.0
    %117 = vmatpush.msra.mxu0 0.0
    %118 = vmatpush.msra.mxu0 0.0
    %119 = vmatpush.msra.mxu0 0.0
    %120 = vmatpush.msra.mxu0 0.0
    %121 = vmatpush.msra.mxu0 %v94
    %122 = vmatmul.f32.gmra.mxu0 %v101
    %v123 = vpop.f32.mrf.mxu0
    %v124 = vadd.f32 %v97, %v123
    %125 = vmatmul.f32.gmra.mxu0 %v104
    %v126 = vpop.f32.mrf.mxu0
    %v127 = vadd.f32 %v97, %v126
    %128 = vdwg.mxu0
    %v129 = vmax.f32 %v124, 0.0
    %v130 = vmax.f32 %v127, 0.0
    %v131 = vld [vmem:[%s3] sm:$0xff]
    %v132 = vld [vmem:[%s3 + $0x8] sm:$0xff]
    %v133 = vld [vmem:[#allocation5] sm:$0x1]
    %v135 = vperm.slane %v133, 0
    %vm137 = vcmask 130048
    %v139 = vsel %vm137, %v129, 0
    %v142 = vsel %vm137, %v130, 0
    %144 = vmatpush.msra.mxu0 0.0
    %145 = vmatpush.msra.mxu0 0.0
    %146 = vmatpush.msra.mxu0 0.0
    %147 = vmatpush.msra.mxu0 0.0
    %148 = vmatpush.msra.mxu0 0.0
    %149 = vmatpush.msra.mxu0 0.0
    %150 = vmatpush.msra.mxu0 0.0
    %151 = vmatpush.msra.mxu0 0.0
    %152 = vmatpush.msra.mxu0 0.0
    %153 = vmatpush.msra.mxu0 0.0
    %154 = vmatpush.msra.mxu0 0.0
    %155 = vmatpush.msra.mxu0 0.0
    %156 = vmatpush.msra.mxu0 0.0
    %157 = vmatpush.msra.mxu0 0.0
    %158 = vmatpush.msra.mxu0 %v132
    %159 = vmatpush.msra.mxu0 %v131
    %160 = vmatmul.f32.gmra.mxu0 %v139
    %v161 = vpop.f32.mrf.mxu0
    %v162 = vadd.f32 %v135, %v161
    %163 = vmatmul.f32.gmra.mxu0 %v142
    %v164 = vpop.f32.mrf.mxu0
    %v165 = vadd.f32 %v135, %v164
    %166 = vdwg.mxu0
    %v167 = vmax.f32 %v162, 0.0
    %v168 = vmax.f32 %v165, 0.0
    %v169 = vld [vmem:[#allocation7] sm:$0xff]
    %v170 = vld [vmem:[#allocation7 + $0x8] sm:$0xff]
    %v171 = vld [vmem:[#allocation7 + $0x10] sm:$0xff]
    %v172 = vld [vmem:[#allocation7 + $0x18] sm:$0xff]
    %v173 = vld [vmem:[#allocation7 + $0x20] sm:$0xff]
    %v174 = vld [vmem:[#allocation7 + $0x28] sm:$0xff]
    %v175 = vld [vmem:[#allocation7 + $0x30] sm:$0xff]
    %v176 = vld [vmem:[#allocation7 + $0x38] sm:$0xff]
    %v177 = vld [vmem:[#allocation7 + $0x40] sm:$0xff]
    %v178 = vld [vmem:[#allocation7 + $0x48] sm:$0xff]
    %v179 = vld [vmem:[#allocation7 + $0x50] sm:$0xff]
    %v180 = vld [vmem:[#allocation7 + $0x58] sm:$0xff]
    %v181 = vld [vmem:[#allocation7 + $0x60] sm:$0xff]
    %v182 = vld [vmem:[#allocation7 + $0x68] sm:$0xff]
    %v183 = vld [vmem:[#allocation7 + $0x70] sm:$0xff]
    %v184 = vld [vmem:[#allocation7 + $0x78] sm:$0xff]
    %v185 = vld [vmem:[#allocation7 + $0x80] sm:$0xff]
    %v186 = vld [vmem:[#allocation7 + $0x88] sm:$0xff]
    %v187 = vld [vmem:[#allocation7 + $0x90] sm:$0xff]
    %v188 = vld [vmem:[#allocation7 + $0x98] sm:$0xff]
    %v189 = vld [vmem:[#allocation7 + $0xa0] sm:$0xff]
    %v190 = vld [vmem:[#allocation7 + $0xa8] sm:$0xff]
    %v191 = vld [vmem:[#allocation7 + $0xb0] sm:$0xff]
    %v192 = vld [vmem:[#allocation7 + $0xb8] sm:$0xff]
    %v193 = vld [vmem:[#allocation7 + $0xc0] sm:$0xff]
    %v194 = vld [vmem:[#allocation7 + $0xc8] sm:$0xff]
    %v195 = vld [vmem:[#allocation7 + $0xd0] sm:$0xff]
    %v196 = vld [vmem:[#allocation7 + $0xd8] sm:$0xff]
    %v197 = vld [vmem:[#allocation7 + $0xe0] sm:$0xff]
    %v198 = vld [vmem:[#allocation7 + $0xe8] sm:$0xff]
    %v199 = vld [vmem:[#allocation7 + $0xf0] sm:$0xff]
    %v200 = vld [vmem:[#allocation7 + $0xf8] sm:$0xff]
    %v201 = vld [vmem:[%s6] sm:$0xf]
    %v203 = vperm.slane %v201, 0
    %v204 = vperm.slane %v201, 1
    %v205 = vperm.slane %v201, 2
    %v206 = vperm.slane %v201, 3
    %vm211 = vcmask 523264
    %v213 = vsel %vm211, %v167, 0
    %v216 = vsel %vm211, %v168, 0
    %218 = vmatpush.msra.mxu0 0.0
    %219 = vmatpush.msra.mxu0 0.0
    %220 = vmatpush.msra.mxu0 0.0
    %221 = vmatpush.msra.mxu0 0.0
    %222 = vmatpush.msra.mxu0 0.0
    %223 = vmatpush.msra.mxu0 0.0
    %224 = vmatpush.msra.mxu0 0.0
    %225 = vmatpush.msra.mxu0 0.0
    %226 = vmatpush.msra.mxu0 %v197
    %227 = vmatpush.msra.mxu0 %v193
    %228 = vmatpush.msra.mxu0 %v189
    %229 = vmatpush.msra.mxu0 %v185
    %230 = vmatpush.msra.mxu0 %v181
    %231 = vmatpush.msra.mxu0 %v177
    %232 = vmatpush.msra.mxu0 %v173
    %233 = vmatpush.msra.mxu0 %v169
    %234 = vmatmul.f32.gmra.mxu0 %v213
    %v235 = vpop.f32.mrf.mxu0
    %v236 = vadd.f32 %v203, %v235
    %237 = vmatmul.f32.gmra.mxu0 %v216
    %v238 = vpop.f32.mrf.mxu0
    %v239 = vadd.f32 %v203, %v238
    %240 = vdwg.mxu0
    %241 = vmatpush.msra.mxu0 0.0
    %242 = vmatpush.msra.mxu0 0.0
    %243 = vmatpush.msra.mxu0 0.0
    %244 = vmatpush.msra.mxu0 0.0
    %245 = vmatpush.msra.mxu0 0.0
    %246 = vmatpush.msra.mxu0 0.0
    %247 = vmatpush.msra.mxu0 0.0
    %248 = vmatpush.msra.mxu0 0.0
    %249 = vmatpush.msra.mxu0 %v198
    %250 = vmatpush.msra.mxu0 %v194
    %251 = vmatpush.msra.mxu0 %v190
    %252 = vmatpush.msra.mxu0 %v186
    %253 = vmatpush.msra.mxu0 %v182
    %254 = vmatpush.msra.mxu0 %v178
    %255 = vmatpush.msra.mxu0 %v174
    %256 = vmatpush.msra.mxu0 %v170
    %257 = vmatmul.f32.gmra.mxu0 %v213
    %v258 = vpop.f32.mrf.mxu0
    %v259 = vadd.f32 %v204, %v258
    %260 = vmatmul.f32.gmra.mxu0 %v216
    %v261 = vpop.f32.mrf.mxu0
    %v262 = vadd.f32 %v204, %v261
    %263 = vdwg.mxu0
    %264 = vmatpush.msra.mxu0 0.0
    %265 = vmatpush.msra.mxu0 0.0
    %266 = vmatpush.msra.mxu0 0.0
    %267 = vmatpush.msra.mxu0 0.0
    %268 = vmatpush.msra.mxu0 0.0
    %269 = vmatpush.msra.mxu0 0.0
    %270 = vmatpush.msra.mxu0 0.0
    %271 = vmatpush.msra.mxu0 0.0
    %272 = vmatpush.msra.mxu0 %v199
    %273 = vmatpush.msra.mxu0 %v195
    %274 = vmatpush.msra.mxu0 %v191
    %275 = vmatpush.msra.mxu0 %v187
    %276 = vmatpush.msra.mxu0 %v183
    %277 = vmatpush.msra.mxu0 %v179
    %278 = vmatpush.msra.mxu0 %v175
    %279 = vmatpush.msra.mxu0 %v171
    %280 = vmatmul.f32.gmra.mxu0 %v213
    %v281 = vpop.f32.mrf.mxu0
    %v282 = vadd.f32 %v205, %v281
    %283 = vmatmul.f32.gmra.mxu0 %v216
    %v284 = vpop.f32.mrf.mxu0
    %v285 = vadd.f32 %v205, %v284
    %286 = vdwg.mxu0
    %287 = vmatpush.msra.mxu0 0.0
    %288 = vmatpush.msra.mxu0 0.0
    %289 = vmatpush.msra.mxu0 0.0
    %290 = vmatpush.msra.mxu0 0.0
    %291 = vmatpush.msra.mxu0 0.0
    %292 = vmatpush.msra.mxu0 0.0
    %293 = vmatpush.msra.mxu0 0.0
    %294 = vmatpush.msra.mxu0 0.0
    %295 = vmatpush.msra.mxu0 %v200
    %296 = vmatpush.msra.mxu0 %v196
    %297 = vmatpush.msra.mxu0 %v192
    %298 = vmatpush.msra.mxu0 %v188
    %299 = vmatpush.msra.mxu0 %v184
    %300 = vmatpush.msra.mxu0 %v180
    %301 = vmatpush.msra.mxu0 %v176
    %302 = vmatpush.msra.mxu0 %v172
    %303 = vmatmul.f32.gmra.mxu0 %v213
    %v304 = vpop.f32.mrf.mxu0
    %v305 = vadd.f32 %v206, %v304
    %306 = vmatmul.f32.gmra.mxu0 %v216
    %v307 = vpop.f32.mrf.mxu0
    %v308 = vadd.f32 %v206, %v307
    %309 = vdwg.mxu0
    %v310 = vmax.f32 %v236, 0.0
    %v311 = vmax.f32 %v259, 0.0
    %v312 = vmax.f32 %v282, 0.0
    %v313 = vmax.f32 %v305, 0.0
    %v314 = vmax.f32 %v239, 0.0
    %v315 = vmax.f32 %v262, 0.0
    %v316 = vmax.f32 %v285, 0.0
    %v317 = vmax.f32 %v308, 0.0
    %v318 = vld [vmem:[#allocation8] sm:$0xff]
    %v319 = vld [vmem:[#allocation8 + $0x8] sm:$0xff]
    %v320 = vld [vmem:[#allocation8 + $0x10] sm:$0xff]
    %v321 = vld [vmem:[#allocation8 + $0x18] sm:$0xff]
    %v322 = vld [vmem:[#allocation8 + $0x20] sm:$0xff]
    %v323 = vld [vmem:[#allocation8 + $0x28] sm:$0xff]
    %v324 = vld [vmem:[#allocation8 + $0x30] sm:$0xff]
    %v325 = vld [vmem:[#allocation8 + $0x38] sm:$0xff]
    %v326 = vld [vmem:[#allocation8 + $0x40] sm:$0xff]
    %v327 = vld [vmem:[#allocation8 + $0x48] sm:$0xff]
    %v328 = vld [vmem:[#allocation8 + $0x50] sm:$0xff]
    %v329 = vld [vmem:[#allocation8 + $0x58] sm:$0xff]
    %v330 = vld [vmem:[#allocation8 + $0x60] sm:$0xff]
    %v331 = vld [vmem:[#allocation8 + $0x68] sm:$0xff]
    %v332 = vld [vmem:[#allocation8 + $0x70] sm:$0xff]
    %v333 = vld [vmem:[#allocation8 + $0x78] sm:$0xff]
    %v334 = vld [vmem:[#allocation8 + $0x80] sm:$0xff]
    %v335 = vld [vmem:[#allocation8 + $0x88] sm:$0xff]
    %v336 = vld [vmem:[#allocation8 + $0x90] sm:$0xff]
    %v337 = vld [vmem:[#allocation8 + $0x98] sm:$0xff]
    %v338 = vld [vmem:[#allocation8 + $0xa0] sm:$0xff]
    %v339 = vld [vmem:[#allocation8 + $0xa8] sm:$0xff]
    %v340 = vld [vmem:[#allocation8 + $0xb0] sm:$0xff]
    %v341 = vld [vmem:[#allocation8 + $0xb8] sm:$0xff]
    %v342 = vld [vmem:[#allocation8 + $0xc0] sm:$0xff]
    %v343 = vld [vmem:[#allocation8 + $0xc8] sm:$0xff]
    %v344 = vld [vmem:[#allocation8 + $0xd0] sm:$0xff]
    %v345 = vld [vmem:[#allocation8 + $0xd8] sm:$0xff]
    %v346 = vld [vmem:[#allocation8 + $0xe0] sm:$0xff]
    %v347 = vld [vmem:[#allocation8 + $0xe8] sm:$0xff]
    %v348 = vld [vmem:[#allocation8 + $0xf0] sm:$0xff]
    %v349 = vld [vmem:[#allocation8 + $0xf8] sm:$0xff]
    %v350 = vld [vmem:[#allocation8 + $0x100] sm:$0xff]
    %v351 = vld [vmem:[#allocation8 + $0x108] sm:$0xff]
    %v352 = vld [vmem:[#allocation8 + $0x110] sm:$0xff]
    %v353 = vld [vmem:[#allocation8 + $0x118] sm:$0xff]
    %v354 = vld [vmem:[#allocation8 + $0x120] sm:$0xff]
    %v355 = vld [vmem:[#allocation8 + $0x128] sm:$0xff]
    %v356 = vld [vmem:[#allocation8 + $0x130] sm:$0xff]
    %v357 = vld [vmem:[#allocation8 + $0x138] sm:$0xff]
    %v358 = vld [vmem:[#allocation8 + $0x140] sm:$0xff]
    %v359 = vld [vmem:[#allocation8 + $0x148] sm:$0xff]
    %v360 = vld [vmem:[#allocation8 + $0x150] sm:$0xff]
    %v361 = vld [vmem:[#allocation8 + $0x158] sm:$0xff]
    %v362 = vld [vmem:[#allocation8 + $0x160] sm:$0xff]
    %v363 = vld [vmem:[#allocation8 + $0x168] sm:$0xff]
    %v364 = vld [vmem:[#allocation8 + $0x170] sm:$0xff]
    %v365 = vld [vmem:[#allocation8 + $0x178] sm:$0xff]
    %v366 = vld [vmem:[#allocation8 + $0x180] sm:$0xff]
    %v367 = vld [vmem:[#allocation8 + $0x188] sm:$0xff]
    %v368 = vld [vmem:[#allocation8 + $0x190] sm:$0xff]
    %v369 = vld [vmem:[#allocation8 + $0x198] sm:$0xff]
    %v370 = vld [vmem:[#allocation8 + $0x1a0] sm:$0xff]
    %v371 = vld [vmem:[#allocation8 + $0x1a8] sm:$0xff]
    %v372 = vld [vmem:[#allocation8 + $0x1b0] sm:$0xff]
    %v373 = vld [vmem:[#allocation8 + $0x1b8] sm:$0xff]
    %v374 = vld [vmem:[#allocation8 + $0x1c0] sm:$0xff]
    %v375 = vld [vmem:[#allocation8 + $0x1c8] sm:$0xff]
    %v376 = vld [vmem:[#allocation8 + $0x1d0] sm:$0xff]
    %v377 = vld [vmem:[#allocation8 + $0x1d8] sm:$0xff]
    %v378 = vld [vmem:[#allocation8 + $0x1e0] sm:$0xff]
    %v379 = vld [vmem:[#allocation8 + $0x1e8] sm:$0xff]
    %v380 = vld [vmem:[#allocation8 + $0x1f0] sm:$0xff]
    %v381 = vld [vmem:[#allocation8 + $0x1f8] sm:$0xff]
    %v382 = vld [vmem:[%s8] sm:$0x1]
    %v384 = vperm.slane %v382, 0
    %386 = vmatpush.msra.mxu0 %v333
    %387 = vmatpush.msra.mxu0 %v332
    %388 = vmatpush.msra.mxu0 %v331
    %389 = vmatpush.msra.mxu0 %v330
    %390 = vmatpush.msra.mxu0 %v329
    %391 = vmatpush.msra.mxu0 %v328
    %392 = vmatpush.msra.mxu0 %v327
    %393 = vmatpush.msra.mxu0 %v326
    %394 = vmatpush.msra.mxu0 %v325
    %395 = vmatpush.msra.mxu0 %v324
    %396 = vmatpush.msra.mxu0 %v323
    %397 = vmatpush.msra.mxu0 %v322
    %398 = vmatpush.msra.mxu0 %v321
    %399 = vmatpush.msra.mxu0 %v320
    %400 = vmatpush.msra.mxu0 %v319
    %401 = vmatpush.msra.mxu0 %v318
    %402 = vmatmul.f32.gmra.mxu0 %v310
    %v403 = vpop.f32.mrf.mxu0
    %v404 = vadd.f32 %v384, %v403
    %405 = vmatmul.f32.gmra.mxu0 %v314
    %v406 = vpop.f32.mrf.mxu0
    %v407 = vadd.f32 %v384, %v406
    %408 = vdwg.mxu0
    %409 = vmatpush.msra.mxu0 %v349
    %410 = vmatpush.msra.mxu0 %v348
    %411 = vmatpush.msra.mxu0 %v347
    %412 = vmatpush.msra.mxu0 %v346
    %413 = vmatpush.msra.mxu0 %v345
    %414 = vmatpush.msra.mxu0 %v344
    %415 = vmatpush.msra.mxu0 %v343
    %416 = vmatpush.msra.mxu0 %v342
    %417 = vmatpush.msra.mxu0 %v341
    %418 = vmatpush.msra.mxu0 %v340
    %419 = vmatpush.msra.mxu0 %v339
    %420 = vmatpush.msra.mxu0 %v338
    %421 = vmatpush.msra.mxu0 %v337
    %422 = vmatpush.msra.mxu0 %v336
    %423 = vmatpush.msra.mxu0 %v335
    %424 = vmatpush.msra.mxu0 %v334
    %425 = vmatmul.f32.gmra.mxu0 %v311
    %v426 = vpop.f32.mrf.mxu0
    %v427 = vadd.f32 %v404, %v426
    %428 = vmatmul.f32.gmra.mxu0 %v315
    %v429 = vpop.f32.mrf.mxu0
    %v430 = vadd.f32 %v407, %v429
    %431 = vdwg.mxu0
    %432 = vmatpush.msra.mxu0 %v365
    %433 = vmatpush.msra.mxu0 %v364
    %434 = vmatpush.msra.mxu0 %v363
    %435 = vmatpush.msra.mxu0 %v362
    %436 = vmatpush.msra.mxu0 %v361
    %437 = vmatpush.msra.mxu0 %v360
    %438 = vmatpush.msra.mxu0 %v359
    %439 = vmatpush.msra.mxu0 %v358
    %440 = vmatpush.msra.mxu0 %v357
    %441 = vmatpush.msra.mxu0 %v356
    %442 = vmatpush.msra.mxu0 %v355
    %443 = vmatpush.msra.mxu0 %v354
    %444 = vmatpush.msra.mxu0 %v353
    %445 = vmatpush.msra.mxu0 %v352
    %446 = vmatpush.msra.mxu0 %v351
    %447 = vmatpush.msra.mxu0 %v350
    %448 = vmatmul.f32.gmra.mxu0 %v312
    %v449 = vpop.f32.mrf.mxu0
    %v450 = vadd.f32 %v427, %v449
    %451 = vmatmul.f32.gmra.mxu0 %v316
    %v452 = vpop.f32.mrf.mxu0
    %v453 = vadd.f32 %v430, %v452
    %454 = vdwg.mxu0
    %455 = vmatpush.msra.mxu0 %v381
    %456 = vmatpush.msra.mxu0 %v380
    %457 = vmatpush.msra.mxu0 %v379
    %458 = vmatpush.msra.mxu0 %v378
    %459 = vmatpush.msra.mxu0 %v377
    %460 = vmatpush.msra.mxu0 %v376
    %461 = vmatpush.msra.mxu0 %v375
    %462 = vmatpush.msra.mxu0 %v374
    %463 = vmatpush.msra.mxu0 %v373
    %464 = vmatpush.msra.mxu0 %v372
    %465 = vmatpush.msra.mxu0 %v371
    %466 = vmatpush.msra.mxu0 %v370
    %467 = vmatpush.msra.mxu0 %v369
    %468 = vmatpush.msra.mxu0 %v368
    %469 = vmatpush.msra.mxu0 %v367
    %470 = vmatpush.msra.mxu0 %v366
    %471 = vmatmul.f32.gmra.mxu0 %v313
    %v472 = vpop.f32.mrf.mxu0
    %v473 = vadd.f32 %v450, %v472
    %474 = vmatmul.f32.gmra.mxu0 %v317
    %v475 = vpop.f32.mrf.mxu0
    %v476 = vadd.f32 %v453, %v475
    %477 = vdwg.mxu0
    %v478 = vtanh.pop %v473
    %v479 = vtanh.pop %v476
    %v480 = vmul.f32 %v478, 4.0
    %v481 = vmul.f32 %v479, 4.0
    %482 = vst [vmem:[#allocation10] sm:$0xff] %v480
    %483 = vst [vmem:[#allocation10 + $0x8] sm:$0xff] %v481
    // Predicated region
    $region54: #{tpu_custom_call.1} parent=1 // pred_check
      _
    $region55: #{tpu_custom_call.1} parent=1 // pred_check_branch
      %485 = sbr.rel (0) target = $region57
    $region56: #{tpu_custom_call.1} parent=1 // pred_region
      %487 = vsyncadd [#allocation4], 0
      %s488 = sshll.u32 [#allocation10], 4
      %s489 = int_to_ptr.vmem [resolvable:$true] %s488
      %s490 = sshll.u32 %s9, 4
      %s491 = int_to_ptr.hbm [resolvable:$true] %s490
      %496 = dma.vmem_to_hbm [thread:$0]  %s489, 256, %s491, [#allocation4], 128, 128, 8
    $region57: #{tpu_custom_call.1} parent=1 // pred_fallthru
      _
    // Predicated region
    $region58: #{tpu_custom_call.1} parent=1 // pred_check
      _
    $region59: #{tpu_custom_call.1} parent=1 // pred_check_branch
      %498 = sbr.rel (0) target = $region61
    $region60: #{tpu_custom_call.1} parent=1 // pred_region
      %500 = dma.done [#allocation4], 256
    $region61: #{tpu_custom_call.1} parent=1 // pred_fallthru
      _
    %501 = vsyncpa [#allocation3], 1
    %502 = vsyncpa [#allocation6], 1
    %503 = vsyncpa [#allocation9], 1
    %504 = vsyncpa [#allocation4], 1

</llo_original>
